<compile_context>
chip_gen: v5e
topology: v5e:2x2
jax: 0.10.0
libtpu: 0.0.40
codegen_flags: <defaults>
</compile_context>

<pallas_src>
import jax
import jax.numpy as jnp
from jax.experimental import pallas as pl
from jax.experimental.pallas import tpu as pltpu


_MAX_CONCURRENT_DMAS = 8      # a handful of in-flight DMAs saturates HBM BW
_MIN_CHUNK_BYTES = 1 << 20    # don't fragment arrays below ~1 MiB per chunk
_ALIGN_1D = 1024              # keep 1-D chunk starts lane/sublane friendly


def _chunk_rows(num_rows, nbytes, ndim):
    """Static (start, nrows) chunks along axis 0, computed at trace time."""
    want = max(1, min(_MAX_CONCURRENT_DMAS, nbytes // _MIN_CHUNK_BYTES))
    want = min(want, num_rows)
    rows = -(-num_rows // want)                     # ceil(num_rows / want)
    if ndim == 1:
        # Round interior 1-D chunk boundaries to a tile-friendly multiple so
        # every DMA slice (except possibly the tail) stays aligned.
        rows = -(-rows // _ALIGN_1D) * _ALIGN_1D
    chunks = []
    start = 0
    while start < num_rows:
        n = min(rows, num_rows - start)
        chunks.append((start, n))
        start += n
    return chunks


def _make_dma_copy_kernel(chunks):
    """Build a kernel that copies `chunks` of rows HBM->HBM via async DMA."""

    def kernel(x_hbm, o_hbm, sems):
        # Issue every chunk's DMA first (all concurrently in flight), then
        # wait for all of them. Chunk starts/sizes are static Python ints, so
        # raggedness along axis 0 costs nothing (no padding, no masking).
        copies = []
        for idx, (start, nrows) in enumerate(chunks):
            cp = pltpu.make_async_copy(
                x_hbm.at[pl.ds(start, nrows)],
                o_hbm.at[pl.ds(start, nrows)],
                sems.at[idx],
            )
            cp.start()
            copies.append(cp)
        for cp in copies:
            cp.wait()

    return kernel


def decoder_forward(x):
    """Pallas implementation of Decoder.forward (identity)."""
    # Degenerate inputs: nothing to copy.
    if x.ndim == 0 or x.size == 0:
        return x

    nbytes = int(x.size) * x.dtype.itemsize
    # NOTE: chunking is along axis 0 only; an array with a tiny leading dim
    # and a huge trailing extent degrades to a single (still correct) DMA.
    chunks = _chunk_rows(int(x.shape[0]), nbytes, x.ndim)

    return pl.pallas_call(
        _make_dma_copy_kernel(chunks),
        out_shape=jax.ShapeDtypeStruct(x.shape, x.dtype),
        in_specs=[pl.BlockSpec(memory_space=pl.ANY)],    # stay in HBM
        out_specs=pl.BlockSpec(memory_space=pl.ANY),     # write HBM directly
        scratch_shapes=[pltpu.SemaphoreType.DMA((len(chunks),))],
    )(x)


if __name__ == "__main__":
    key = jax.random.PRNGKey(0)
    # Small NCHW input consistent with a decoder-style module.
    x = jax.random.normal(key, (2, 4, 16, 16), dtype=jnp.float32)

    y = decoder_forward(x)
    jax.block_until_ready(y)

    assert y.shape == x.shape and y.dtype == x.dtype
    assert bool(jnp.all(y == x))
    print("KERNEL_OK")
</pallas_src>

<mosaic_0001>
module attributes {stable_mosaic.version = 11 : i64} {
  func.func @kernel(%arg0: memref<2x4x16x16xf32, #tpu.memory_space<any>>, %arg1: memref<2x4x16x16xf32, #tpu.memory_space<any>>, %arg2: memref<1x!tpu.dma_semaphore, #tpu.memory_space<semaphore_mem>>) attributes {dimension_semantics = [], scalar_prefetch = 0 : i64, scratch_operands = 1 : i64, tpu.core_type = #tpu.core_type<tc>} {
    %c0_i32 = arith.constant 0 : i32
    %c0_i32_0 = arith.constant 0 : i32
    %c0_i32_1 = arith.constant 0 : i32
    %c0_i32_2 = arith.constant 0 : i32
    %c0_i32_3 = arith.constant 0 : i32
    %0 = tpu.memref_slice %arg0[%c0_i32_0, %c0_i32_1, %c0_i32_2, %c0_i32_3] : memref<2x4x16x16xf32, #tpu.memory_space<any>> -> memref<2x4x16x16xf32, #tpu.memory_space<any>>
    %c0_i32_4 = arith.constant 0 : i32
    %c0_i32_5 = arith.constant 0 : i32
    %c0_i32_6 = arith.constant 0 : i32
    %c0_i32_7 = arith.constant 0 : i32
    %1 = tpu.memref_slice %arg1[%c0_i32_4, %c0_i32_5, %c0_i32_6, %c0_i32_7] : memref<2x4x16x16xf32, #tpu.memory_space<any>> -> memref<2x4x16x16xf32, #tpu.memory_space<any>>
    %2 = tpu.memref_slice %arg2[%c0_i32] : memref<1x!tpu.dma_semaphore, #tpu.memory_space<semaphore_mem>> -> memref<1x!tpu.dma_semaphore, #tpu.memory_space<semaphore_mem>>
    %3 = tpu.memref_squeeze %2 : memref<1x!tpu.dma_semaphore, #tpu.memory_space<semaphore_mem>> -> memref<!tpu.dma_semaphore, #tpu.memory_space<semaphore_mem>>
    tpu.enqueue_dma source(%0 : memref<2x4x16x16xf32, #tpu.memory_space<any>>) target(%1 : memref<2x4x16x16xf32, #tpu.memory_space<any>>) target_semaphore(%3 : memref<!tpu.dma_semaphore, #tpu.memory_space<semaphore_mem>>)
    %c0_i32_8 = arith.constant 0 : i32
    %c0_i32_9 = arith.constant 0 : i32
    %c0_i32_10 = arith.constant 0 : i32
    %c0_i32_11 = arith.constant 0 : i32
    %c0_i32_12 = arith.constant 0 : i32
    %4 = tpu.memref_slice %arg0[%c0_i32_9, %c0_i32_10, %c0_i32_11, %c0_i32_12] : memref<2x4x16x16xf32, #tpu.memory_space<any>> -> memref<2x4x16x16xf32, #tpu.memory_space<any>>
    %c0_i32_13 = arith.constant 0 : i32
    %c0_i32_14 = arith.constant 0 : i32
    %c0_i32_15 = arith.constant 0 : i32
    %c0_i32_16 = arith.constant 0 : i32
    %5 = tpu.memref_slice %arg1[%c0_i32_13, %c0_i32_14, %c0_i32_15, %c0_i32_16] : memref<2x4x16x16xf32, #tpu.memory_space<any>> -> memref<2x4x16x16xf32, #tpu.memory_space<any>>
    %6 = tpu.memref_slice %arg2[%c0_i32_8] : memref<1x!tpu.dma_semaphore, #tpu.memory_space<semaphore_mem>> -> memref<1x!tpu.dma_semaphore, #tpu.memory_space<semaphore_mem>>
    %7 = tpu.memref_squeeze %6 : memref<1x!tpu.dma_semaphore, #tpu.memory_space<semaphore_mem>> -> memref<!tpu.dma_semaphore, #tpu.memory_space<semaphore_mem>>
    tpu.wait_dma2 semaphore(%7 : memref<!tpu.dma_semaphore, #tpu.memory_space<semaphore_mem>>) src(%4 : memref<2x4x16x16xf32, #tpu.memory_space<any>>) dst(%5 : memref<2x4x16x16xf32, #tpu.memory_space<any>>)
    return
  }
}

</mosaic_0001>

<llo_original>
// kernel: tpu_custom_call.1
$region0: #{tpu_custom_call.1}
  #allocation0 [shape = 'u32[]', space=smem, size = 0x4, offset = 0x4, fixed_abs, tag = 'smem constant byte address 0x4 - core index']
  #allocation1 [shape = 'u32[72,128]{1,0:T(1,128)}', space=vmem, size = 0x9000, scoped, tag = 'internal scratch']
  #allocation2 [shape = 's32[1]{0}', space=sflag, size = 0x4, scoped, tag = 'scratch operand']
  #allocation3 [shape = 's32[]', space=sflag, size = 0x4, offset = 0, fixed_abs, tag = 'sflag constant byte address 0x0 - dummy sync flag']
  #allocation4 [shape = 'u32[0]{0}', space=smem, size = 0, offset = 0, fixed_abs, tag = 'smem constant byte address 0x0 - null']
  %s0 = inlined_call_operand.hbm [shape: f32[2,4,16,16], index: 0, kind: input, shape index: {}]
  %s1 = inlined_call_operand.hbm [shape: f32[2,4,16,16], index: 1, kind: output, shape index: {}]
  %s2 = sld [smem:[#allocation0]]
  $region2: #{tpu_custom_call.1} parent=0
    _
  %s4 = ssub.s32 1, %s2
  %s5 = scalar_select 0, %s4, %s2
  %s7 = sshll.u32 1, 14
  %s8 = sxor.u32 4294967295, %s7
  %s10 = sshll.u32 %s0, 4
  %s11 = int_to_ptr.hbm [resolvable:$true] %s10
  %s12 = sshll.u32 %s1, 4
  %s13 = int_to_ptr.hbm [resolvable:$true] %s12
  %16 = dma.general %s11, 2048, %s13, [#allocation2], [#allocation3], [#allocation4], 0, 0
  %s17 = smul.u32 2, 4
  %s18 = smul.u32 %s17, 16
  %s19 = smul.u32 %s18, 1
  %s20 = sshll.u32 %s19, 4
  %21 = dma.done [#allocation2], %s20
  %22 = vsyncmov [#allocation2]
  %s23 = vpop.sfrf %22
  %p24 = scmp.eq.s32.totalorder %s23, 0
  %p25 = pneg %p24
  %27 = shalt.err (%p25)

</llo_original>
